<compile_context>
chip_gen: v7x
topology: tpu7x:2x2x1
jax: 0.10.0
libtpu: 0.0.40
codegen_flags: <defaults>
</compile_context>

<pallas_src>
import jax
import jax.numpy as jnp
from jax.experimental import pallas as pl
from jax.experimental.pallas import tpu as pltpu

_SUBLANE = 8


def _round_up(n, m):
    return ((n + m - 1) // m) * m


def _mlp_kernel(x_ref, w1_ref, b1_ref, w2_ref, b2_ref, out_ref):
    # fc1: (TB, I) @ (I, H) + (1, H), f32 accumulation on the MXU.
    h = jnp.dot(x_ref[...], w1_ref[...], preferred_element_type=jnp.float32)
    h = jnp.maximum(h + b1_ref[...].astype(jnp.float32), 0.0)
    # fc2 on the narrow (H, O) weight; epilogue stays narrow (TB, O).
    y = jnp.dot(h, w2_ref[...].astype(jnp.float32),
                preferred_element_type=jnp.float32)
    y = y + b2_ref[...].astype(jnp.float32)
    out_ref[...] = jax.nn.sigmoid(y).astype(out_ref.dtype)


def skeleton_pose_classifier(x, w1, b1, w2, b2, *, block_b=4096):
    """Fused 2-layer MLP forward (Linear -> ReLU -> Linear -> Sigmoid).

    x:  (B, I)
    w1: (I, H), b1: (H,)   fc1 params (weight pre-transposed vs torch)
    w2: (H, O), b2: (O,)   fc2 params (weight pre-transposed vs torch)
    Returns (B, O) in x.dtype.
    """
    B, I = x.shape
    H = w1.shape[1]
    O = w2.shape[1]

    b1_r = b1.reshape(1, H)
    b2_r = b2.reshape(1, O)

    # ---- batch tiling: stream x/out in (TB, ...) tiles, keep weights resident ----
    B_up = _round_up(B, _SUBLANE)
    TB = min(block_b, B_up)
    # v7x megacore: if the whole (large) batch would be one grid step, split it
    # into two so both TensorCores get work (rows are independent).
    if TB == B_up and B_up >= 1024:
        TB = pl.cdiv(B_up, 2)
    TB = _round_up(TB, _SUBLANE)                       # (8,128) sublane constraint

    grid = (pl.cdiv(B, TB),)                           # ragged last block is OK:
    # rows are independent; Pallas masks out-of-bounds writes on the last tile.

    out = pl.pallas_call(
        _mlp_kernel,
        out_shape=jax.ShapeDtypeStruct((B, O), x.dtype),
        grid=grid,
        in_specs=[
            pl.BlockSpec((TB, I), lambda b: (b, 0)),   # x: streamed over batch
            pl.BlockSpec((I, H), lambda b: (0, 0)),    # w1: resident
            pl.BlockSpec((1, H), lambda b: (0, 0)),    # b1: resident
            pl.BlockSpec((H, O), lambda b: (0, 0)),    # w2: resident (narrow)
            pl.BlockSpec((1, O), lambda b: (0, 0)),    # b2: resident (narrow)
        ],
        out_specs=pl.BlockSpec((TB, O), lambda b: (b, 0)),   # narrow (TB, O) block
        compiler_params=pltpu.CompilerParams(
            # Batch axis is embarrassingly parallel -> megacore sharding on v7x.
            dimension_semantics=("parallel",),
        ),
    )(x, w1, b1_r, w2, b2_r)

    return out


def _reference(x, w1, b1, w2, b2):
    h = jnp.maximum(x @ w1 + b1, 0.0)
    return jax.nn.sigmoid(h @ w2 + b2)


if __name__ == "__main__":
    # Small shapes consistent with the module: batch=8, input=64, hidden=32, output=2
    batch, input_size, hidden_size, output_size = 8, 64, 32, 2

    key = jax.random.PRNGKey(0)
    kx, kw1, kb1, kw2, kb2 = jax.random.split(key, 5)

    x = jax.random.normal(kx, (batch, input_size), dtype=jnp.float32)
    # Deterministic synthetic parameters (nn.Linear-like uniform init scale).
    w1 = jax.random.uniform(kw1, (input_size, hidden_size), jnp.float32,
                            -1.0 / input_size ** 0.5, 1.0 / input_size ** 0.5)
    b1 = jax.random.uniform(kb1, (hidden_size,), jnp.float32,
                            -1.0 / input_size ** 0.5, 1.0 / input_size ** 0.5)
    w2 = jax.random.uniform(kw2, (hidden_size, output_size), jnp.float32,
                            -1.0 / hidden_size ** 0.5, 1.0 / hidden_size ** 0.5)
    b2 = jax.random.uniform(kb2, (output_size,), jnp.float32,
                            -1.0 / hidden_size ** 0.5, 1.0 / hidden_size ** 0.5)

    out = skeleton_pose_classifier(x, w1, b1, w2, b2)
    out = jax.block_until_ready(out)
    ref = _reference(x, w1, b1, w2, b2)
    assert out.shape == (batch, output_size)
    assert jnp.allclose(out, ref, atol=1e-5, rtol=1e-5)

    # Secondary check: batch not a multiple of the tile size exercises the
    # multi-step batch grid and the ragged (masked) trailing block path.
    x2 = jax.random.normal(jax.random.PRNGKey(1), (20, input_size), jnp.float32)
    out2 = jax.block_until_ready(
        skeleton_pose_classifier(x2, w1, b1, w2, b2, block_b=8))
    ref2 = _reference(x2, w1, b1, w2, b2)
    assert out2.shape == (20, output_size)
    assert jnp.allclose(out2, ref2, atol=1e-5, rtol=1e-5)

    # Third check: large-ish batch exercises the megacore 2-step split path.
    x3 = jax.random.normal(jax.random.PRNGKey(2), (1536, input_size), jnp.float32)
    out3 = jax.block_until_ready(skeleton_pose_classifier(x3, w1, b1, w2, b2))
    ref3 = _reference(x3, w1, b1, w2, b2)
    assert out3.shape == (1536, output_size)
    assert jnp.allclose(out3, ref3, atol=1e-5, rtol=1e-5)

    print("KERNEL_OK")
</pallas_src>

<mosaic_0001>
module attributes {stable_mosaic.version = 11 : i64} {
  func.func @_mlp_kernel(%arg0: i32, %arg1: memref<8x64xf32, #tpu.memory_space<vmem>>, %arg2: memref<64x32xf32, #tpu.memory_space<vmem>>, %arg3: memref<1x32xf32, #tpu.memory_space<vmem>>, %arg4: memref<32x2xf32, #tpu.memory_space<vmem>>, %arg5: memref<1x2xf32, #tpu.memory_space<vmem>>, %arg6: memref<8x2xf32, #tpu.memory_space<vmem>>) attributes {dimension_semantics = [#tpu.dimension_semantics<parallel>], iteration_bounds = array<i64: 1>, scalar_prefetch = 0 : i64, scratch_operands = 0 : i64, tpu.core_type = #tpu.core_type<tc>, window_params = [{transform_indices = @transform_0, window_bounds = array<i64: 8, 64>}, {pipeline_mode = #tpu.pipeline_mode<synchronous>, transform_indices = @transform_1, window_bounds = array<i64: 64, 32>}, {pipeline_mode = #tpu.pipeline_mode<synchronous>, transform_indices = @transform_2, window_bounds = array<i64: 1, 32>}, {pipeline_mode = #tpu.pipeline_mode<synchronous>, transform_indices = @transform_3, window_bounds = array<i64: 32, 2>}, {pipeline_mode = #tpu.pipeline_mode<synchronous>, transform_indices = @transform_4, window_bounds = array<i64: 1, 2>}, {transform_indices = @transform_5, window_bounds = array<i64: 8, 2>}]} {
    %c0 = arith.constant 0 : index
    %c0_0 = arith.constant 0 : index
    %0 = vector.load %arg1[%c0, %c0_0] : memref<8x64xf32, #tpu.memory_space<vmem>>, vector<8x64xf32>
    %c0_1 = arith.constant 0 : index
    %c0_2 = arith.constant 0 : index
    %1 = vector.load %arg2[%c0_1, %c0_2] : memref<64x32xf32, #tpu.memory_space<vmem>>, vector<64x32xf32>
    %cst = arith.constant dense<0.000000e+00> : vector<8x32xf32>
    %2 = tpu.matmul %0, %1, %cst {dimension_numbers = #tpu.dot_dimension_numbers<[1], [0], [0], [1], [0, 0, 1, 1], [], []>} : vector<8x64xf32>, vector<64x32xf32>, vector<8x32xf32> -> vector<8x32xf32>
    %c0_3 = arith.constant 0 : index
    %c0_4 = arith.constant 0 : index
    %3 = vector.load %arg3[%c0_3, %c0_4] : memref<1x32xf32, #tpu.memory_space<vmem>>, vector<1x32xf32>
    %4 = vector.broadcast %3 : vector<1x32xf32> to vector<8x32xf32>
    %5 = arith.addf %2, %4 : vector<8x32xf32>
    %cst_5 = arith.constant 0.000000e+00 : f32
    %6 = vector.broadcast %cst_5 : f32 to vector<8x32xf32>
    %7 = arith.maximumf %5, %6 : vector<8x32xf32>
    %c0_6 = arith.constant 0 : index
    %c0_7 = arith.constant 0 : index
    %8 = vector.load %arg4[%c0_6, %c0_7] : memref<32x2xf32, #tpu.memory_space<vmem>>, vector<32x2xf32>
    %cst_8 = arith.constant dense<0.000000e+00> : vector<8x2xf32>
    %9 = tpu.matmul %7, %8, %cst_8 {dimension_numbers = #tpu.dot_dimension_numbers<[1], [0], [0], [1], [0, 0, 1, 1], [], []>} : vector<8x32xf32>, vector<32x2xf32>, vector<8x2xf32> -> vector<8x2xf32>
    %c0_9 = arith.constant 0 : index
    %c0_10 = arith.constant 0 : index
    %10 = vector.load %arg5[%c0_9, %c0_10] : memref<1x2xf32, #tpu.memory_space<vmem>>, vector<1x2xf32>
    %11 = vector.broadcast %10 : vector<1x2xf32> to vector<8x2xf32>
    %12 = arith.addf %9, %11 : vector<8x2xf32>
    %13 = arith.negf %12 : vector<8x2xf32>
    %14 = math.exp %13 : vector<8x2xf32>
    %cst_11 = arith.constant 1.000000e+00 : f32
    %15 = vector.broadcast %cst_11 : f32 to vector<8x2xf32>
    %16 = arith.addf %15, %14 : vector<8x2xf32>
    %17 = arith.divf %15, %16 : vector<8x2xf32>
    %c0_12 = arith.constant 0 : index
    %c0_13 = arith.constant 0 : index
    %18 = vector.load %arg6[%c0_12, %c0_13] : memref<8x2xf32, #tpu.memory_space<vmem>>, vector<8x2xf32>
    tpu.vector_store %arg6[%c0_12, %c0_13], %17 {strides = array<i32>} : memref<8x2xf32, #tpu.memory_space<vmem>>, vector<8x2xf32>,
    return
  }
  func.func @transform_0(%arg0: i32) -> (i32, i32) {
    %c0_i32 = arith.constant 0 : i32
    %c0_i32_0 = arith.constant 0 : i32
    return %arg0, %c0_i32 : i32, i32
  }
  func.func @transform_1(%arg0: i32) -> (i32, i32) {
    %c0_i32 = arith.constant 0 : i32
    %c0_i32_0 = arith.constant 0 : i32
    %c0_i32_1 = arith.constant 0 : i32
    return %c0_i32, %c0_i32_0 : i32, i32
  }
  func.func @transform_2(%arg0: i32) -> (i32, i32) {
    %c0_i32 = arith.constant 0 : i32
    %c0_i32_0 = arith.constant 0 : i32
    %c0_i32_1 = arith.constant 0 : i32
    return %c0_i32, %c0_i32_0 : i32, i32
  }
  func.func @transform_3(%arg0: i32) -> (i32, i32) {
    %c0_i32 = arith.constant 0 : i32
    %c0_i32_0 = arith.constant 0 : i32
    %c0_i32_1 = arith.constant 0 : i32
    return %c0_i32, %c0_i32_0 : i32, i32
  }
  func.func @transform_4(%arg0: i32) -> (i32, i32) {
    %c0_i32 = arith.constant 0 : i32
    %c0_i32_0 = arith.constant 0 : i32
    %c0_i32_1 = arith.constant 0 : i32
    return %c0_i32, %c0_i32_0 : i32, i32
  }
  func.func @transform_5(%arg0: i32) -> (i32, i32) {
    %c0_i32 = arith.constant 0 : i32
    %c0_i32_0 = arith.constant 0 : i32
    return %arg0, %c0_i32 : i32, i32
  }
}

</mosaic_0001>

<llo_original>
// kernel: tpu_custom_call.1
$region0: #{tpu_custom_call.1}
  #allocation0 [shape = 'u32[]', space=smem, size = 0x4, offset = 0x4, fixed_abs, tag = 'smem constant byte address 0x4 - core index']
  #allocation1 [shape = 'u32[144,128]{1,0:T(1,128)}', space=vmem, size = 0x12000, scoped, tag = 'internal scratch']
  %s0 = inlined_call_operand.vmem [shape: f32[8,64], index: 0, kind: input, shape index: {}]
  %s1 = inlined_call_operand.vmem [shape: f32[64,32], index: 1, kind: input, shape index: {}]
  %s2 = inlined_call_operand.vmem [shape: f32[1,32], index: 2, kind: input, shape index: {}]
  %s3 = inlined_call_operand.vmem [shape: f32[32,2], index: 3, kind: input, shape index: {}]
  %s4 = inlined_call_operand.vmem [shape: f32[1,2], index: 4, kind: input, shape index: {}]
  %s5 = inlined_call_operand.vmem [shape: f32[8,2], index: 5, kind: output, shape index: {}]
  %s6 = sld [smem:[#allocation0]]
  $region30: #{tpu_custom_call.1} parent=0
    _
  %s8 = ssub.s32 1, %s6
  %s9 = scalar_select 0, %s8, %s6
  // Predicated region
  $region2: #{tpu_custom_call.1} parent=0 // pred_check
    _
  $region3: #{tpu_custom_call.1} parent=0 // pred_check_branch
    %11 = sbr.rel (0) target = $region5
  $region4: #{tpu_custom_call.1} parent=0 // pred_region
    _
  $region5: #{tpu_custom_call.1} parent=0 // pred_fallthru
    _
  // Predicated region
  $region6: #{tpu_custom_call.1} parent=0 // pred_check
    _
  $region7: #{tpu_custom_call.1} parent=0 // pred_check_branch
    %13 = sbr.rel (0) target = $region9
  $region8: #{tpu_custom_call.1} parent=0 // pred_region
    _
  $region9: #{tpu_custom_call.1} parent=0 // pred_fallthru
    _
  // Predicated region
  $region10: #{tpu_custom_call.1} parent=0 // pred_check
    _
  $region11: #{tpu_custom_call.1} parent=0 // pred_check_branch
    %15 = sbr.rel (0) target = $region13
  $region12: #{tpu_custom_call.1} parent=0 // pred_region
    _
  $region13: #{tpu_custom_call.1} parent=0 // pred_fallthru
    _
  // Predicated region
  $region14: #{tpu_custom_call.1} parent=0 // pred_check
    _
  $region15: #{tpu_custom_call.1} parent=0 // pred_check_branch
    %17 = sbr.rel (0) target = $region17
  $region16: #{tpu_custom_call.1} parent=0 // pred_region
    _
  $region17: #{tpu_custom_call.1} parent=0 // pred_fallthru
    _
  // Predicated region
  $region18: #{tpu_custom_call.1} parent=0 // pred_check
    _
  $region19: #{tpu_custom_call.1} parent=0 // pred_check_branch
    %19 = sbr.rel (0) target = $region21
  $region20: #{tpu_custom_call.1} parent=0 // pred_region
    _
  $region21: #{tpu_custom_call.1} parent=0 // pred_fallthru
    _
  %v20 = vld [vmem:[%s0] sm:$0xff]
  %v21 = vld [vmem:[%s1] sm:$0xff]
  %v22 = vld [vmem:[%s1 + $0x8] sm:$0xff]
  %v23 = vld [vmem:[%s1 + $0x10] sm:$0xff]
  %v24 = vld [vmem:[%s1 + $0x18] sm:$0xff]
  %v25 = vld [vmem:[%s1 + $0x20] sm:$0xff]
  %v26 = vld [vmem:[%s1 + $0x28] sm:$0xff]
  %v27 = vld [vmem:[%s1 + $0x30] sm:$0xff]
  %v28 = vld [vmem:[%s1 + $0x38] sm:$0xff]
  %v29 = vld [vmem:[%s2] sm:$0x1]
  %v31 = vlaneseq
  %v32 = vshrl.u32 %v31, 7
  %v33 = vsub.s32 0, %v32
  %v34 = vrot.slane %v29, %v33
  %vm36 = vcmask 523264
  %v38 = vsel %vm36, %v20, 0
  %40 = vmatprep.subr.mxu0 0.0
  %41 = vmatpush1.msra.mxu0 %v21
  %42 = vmatprep.subr.mxu0 0.0
  %43 = vmatpush1.msra.mxu0 %v22
  %44 = vmatprep.subr.mxu0 0.0
  %45 = vmatpush1.msra.mxu0 %v23
  %46 = vmatprep.subr.mxu0 0.0
  %47 = vmatpush1.msra.mxu0 %v24
  %48 = vmatprep.subr.mxu0 0.0
  %49 = vmatpush1.msra.mxu0 %v25
  %50 = vmatprep.subr.mxu0 0.0
  %51 = vmatpush1.msra.mxu0 %v26
  %52 = vmatprep.subr.mxu0 0.0
  %53 = vmatpush1.msra.mxu0 %v27
  %54 = vmatprep.subr.mxu0 0.0
  %55 = vmatpush1.msra.mxu0 %v28
  %56 = vmatprep.subr.mxu0 0.0
  %57 = vmatpush1.msra.mxu0 0.0
  %58 = vmatprep.subr.mxu0 0.0
  %59 = vmatpush1.msra.mxu0 0.0
  %60 = vmatprep.subr.mxu0 0.0
  %61 = vmatpush1.msra.mxu0 0.0
  %62 = vmatprep.subr.mxu0 0.0
  %63 = vmatpush1.msra.mxu0 0.0
  %64 = vmatprep.subr.mxu0 0.0
  %65 = vmatpush1.msra.mxu0 0.0
  %66 = vmatprep.subr.mxu0 0.0
  %67 = vmatpush1.msra.mxu0 0.0
  %68 = vmatprep.subr.mxu0 0.0
  %69 = vmatpush1.msra.mxu0 0.0
  %70 = vmatprep.subr.mxu0 0.0
  %71 = vmatpush1.msra.mxu0 0.0
  %72 = vmatprep.subr.mxu0 0.0
  %73 = vmatpush1.msra.mxu0 0.0
  %74 = vmatprep.subr.mxu0 0.0
  %75 = vmatpush1.msra.mxu0 0.0
  %76 = vmatprep.subr.mxu0 0.0
  %77 = vmatpush1.msra.mxu0 0.0
  %78 = vmatprep.subr.mxu0 0.0
  %79 = vmatpush1.msra.mxu0 0.0
  %80 = vmatprep.subr.mxu0 0.0
  %81 = vmatpush1.msra.mxu0 0.0
  %82 = vmatprep.subr.mxu0 0.0
  %83 = vmatpush1.msra.mxu0 0.0
  %84 = vmatprep.subr.mxu0 0.0
  %85 = vmatpush1.msra.mxu0 0.0
  %86 = vmatprep.subr.mxu0 0.0
  %87 = vmatpush1.msra.mxu0 0.0
  %88 = vmatprep.subr.mxu0 0.0
  %89 = vmatpush1.msra.mxu0 0.0
  %90 = vmatprep.subr.mxu0 0.0
  %91 = vmatpush1.msra.mxu0 0.0
  %92 = vmatprep.subr.mxu0 0.0
  %93 = vmatpush1.msra.mxu0 0.0
  %94 = vmatprep.subr.mxu0 0.0
  %95 = vmatpush1.msra.mxu0 0.0
  %96 = vmatprep.subr.mxu0 0.0
  %97 = vmatpush1.msra.mxu0 0.0
  %98 = vmatprep.subr.mxu0 0.0
  %99 = vmatpush1.msra.mxu0 0.0
  %100 = vmatprep.subr.mxu0 0.0
  %101 = vmatpush1.msra.mxu0 0.0
  %102 = vmatprep.subr.mxu0 0.0
  %103 = vmatpush1.msra.mxu0 0.0
  %104 = vmatprep.mubr.f32.mxu0 0.0
  %105 = vmatmul.mubr.f32.gmra.mrb[0].mxu0 %v38
  %v106 = vpop.f32.mrb[0].mxu0
  %v107 = vadd.f32 %v34, %v106
  %v108 = vpop.f32.mrb[0].mxu0
  %109 = vdwg.mxu0
  %v110 = vmax.f32 %v107, 0.0
  %v111 = vld [vmem:[%s3] sm:$0xff]
  %v112 = vld [vmem:[%s3 + $0x8] sm:$0xff]
  %v113 = vld [vmem:[%s3 + $0x10] sm:$0xff]
  %v114 = vld [vmem:[%s3 + $0x18] sm:$0xff]
  %v115 = vld [vmem:[%s4] sm:$0x1]
  %v117 = vlaneseq
  %v118 = vshrl.u32 %v117, 7
  %v119 = vsub.s32 0, %v118
  %v120 = vrot.slane %v115, %v119
  %vm122 = vcmask 261120
  %v124 = vsel %vm122, %v110, 0
  %126 = vmatprep.subr.mxu0 0.0
  %127 = vmatpush1.msra.mxu0 %v111
  %128 = vmatprep.subr.mxu0 0.0
  %129 = vmatpush1.msra.mxu0 %v112
  %130 = vmatprep.subr.mxu0 0.0
  %131 = vmatpush1.msra.mxu0 %v113
  %132 = vmatprep.subr.mxu0 0.0
  %133 = vmatpush1.msra.mxu0 %v114
  %134 = vmatprep.subr.mxu0 0.0
  %135 = vmatpush1.msra.mxu0 0.0
  %136 = vmatprep.subr.mxu0 0.0
  %137 = vmatpush1.msra.mxu0 0.0
  %138 = vmatprep.subr.mxu0 0.0
  %139 = vmatpush1.msra.mxu0 0.0
  %140 = vmatprep.subr.mxu0 0.0
  %141 = vmatpush1.msra.mxu0 0.0
  %142 = vmatprep.subr.mxu0 0.0
  %143 = vmatpush1.msra.mxu0 0.0
  %144 = vmatprep.subr.mxu0 0.0
  %145 = vmatpush1.msra.mxu0 0.0
  %146 = vmatprep.subr.mxu0 0.0
  %147 = vmatpush1.msra.mxu0 0.0
  %148 = vmatprep.subr.mxu0 0.0
  %149 = vmatpush1.msra.mxu0 0.0
  %150 = vmatprep.subr.mxu0 0.0
  %151 = vmatpush1.msra.mxu0 0.0
  %152 = vmatprep.subr.mxu0 0.0
  %153 = vmatpush1.msra.mxu0 0.0
  %154 = vmatprep.subr.mxu0 0.0
  %155 = vmatpush1.msra.mxu0 0.0
  %156 = vmatprep.subr.mxu0 0.0
  %157 = vmatpush1.msra.mxu0 0.0
  %158 = vmatprep.subr.mxu0 0.0
  %159 = vmatpush1.msra.mxu0 0.0
  %160 = vmatprep.subr.mxu0 0.0
  %161 = vmatpush1.msra.mxu0 0.0
  %162 = vmatprep.subr.mxu0 0.0
  %163 = vmatpush1.msra.mxu0 0.0
  %164 = vmatprep.subr.mxu0 0.0
  %165 = vmatpush1.msra.mxu0 0.0
  %166 = vmatprep.subr.mxu0 0.0
  %167 = vmatpush1.msra.mxu0 0.0
  %168 = vmatprep.subr.mxu0 0.0
  %169 = vmatpush1.msra.mxu0 0.0
  %170 = vmatprep.subr.mxu0 0.0
  %171 = vmatpush1.msra.mxu0 0.0
  %172 = vmatprep.subr.mxu0 0.0
  %173 = vmatpush1.msra.mxu0 0.0
  %174 = vmatprep.subr.mxu0 0.0
  %175 = vmatpush1.msra.mxu0 0.0
  %176 = vmatprep.subr.mxu0 0.0
  %177 = vmatpush1.msra.mxu0 0.0
  %178 = vmatprep.subr.mxu0 0.0
  %179 = vmatpush1.msra.mxu0 0.0
  %180 = vmatprep.subr.mxu0 0.0
  %181 = vmatpush1.msra.mxu0 0.0
  %182 = vmatprep.subr.mxu0 0.0
  %183 = vmatpush1.msra.mxu0 0.0
  %184 = vmatprep.subr.mxu0 0.0
  %185 = vmatpush1.msra.mxu0 0.0
  %186 = vmatprep.subr.mxu0 0.0
  %187 = vmatpush1.msra.mxu0 0.0
  %188 = vmatprep.subr.mxu0 0.0
  %189 = vmatpush1.msra.mxu0 0.0
  %190 = vmatprep.mubr.f32.mxu0 0.0
  %191 = vmatmul.mubr.f32.gmra.mrb[0].mxu0 %v124
  %v192 = vpop.f32.mrb[0].mxu0
  %v193 = vadd.f32 %v120, %v192
  %v194 = vpop.f32.mrb[0].mxu0
  %195 = vdwg.mxu0
  %v196 = vxor.u32 %v193, 2147483648
  %v197 = vmul.f32 %v196, 1.442695
  %v198 = vpow.pop %v197
  %v199 = vadd.f32 %v198, 1.0
  %v200 = vrcp.pop %v199
  %v201 = vmul.f32 1.0, %v200
  %vm202 = vcmask 15360
  %203 = vst.msk [vmem:[%s5] sm:$0xff] %vm202, %v201
  // Predicated region
  $region22: #{tpu_custom_call.1} parent=0 // pred_check
    _
  $region23: #{tpu_custom_call.1} parent=0 // pred_check_branch
    %205 = sbr.rel (0) target = $region25
  $region24: #{tpu_custom_call.1} parent=0 // pred_region
    _
  $region25: #{tpu_custom_call.1} parent=0 // pred_fallthru
    _
  // Predicated region
  $region26: #{tpu_custom_call.1} parent=0 // pred_check
    _
  $region27: #{tpu_custom_call.1} parent=0 // pred_check_branch
    %207 = sbr.rel (0) target = $region29
  $region28: #{tpu_custom_call.1} parent=0 // pred_region
    _
  $region29: #{tpu_custom_call.1} parent=0 // pred_fallthru
    _

</llo_original>
